<compile_context>
chip_gen: v6e
topology: v6e:2x2x1
jax: 0.10.0
libtpu: 0.0.40
codegen_flags: <defaults>
</compile_context>

<pallas_src>
import math

import jax
import jax.numpy as jnp
from jax.experimental import pallas as pl
from jax.experimental.pallas import tpu as pltpu

_LANE = 128          # lane width / class-padding width
_CLASS_PAD = 128


# ---------------------------------------------------------------------------
# Kernel: y_t = transpose(log_softmax(x @ W_pad + b_pad))[:C, :]
# ---------------------------------------------------------------------------
def _nsp_kernel(x_ref, w_ref, b_ref, o_ref):
    # (TM, H) @ (H, 128) on the MXU, f32 accumulate.
    logits = jnp.dot(x_ref[...], w_ref[...],
                     preferred_element_type=jnp.float32) + b_ref[...]
    # Pad columns carry bias = -1e30: exp underflows to exactly 0, so max /
    # LSE are effectively over the 2 real classes only.
    m = jnp.max(logits, axis=-1, keepdims=True)
    lse = m + jnp.log(jnp.sum(jnp.exp(logits - m), axis=-1, keepdims=True))
    logprobs = logits - lse                       # (TM, 128) f32
    # XLU transpose (that slot has slack in this HBM-bound kernel); keep only
    # the real classes -> lane-dense (C, TM) store instead of a (TM, 128) one.
    lp_t = jnp.transpose(logprobs)                # (128, TM)
    o_ref[...] = lp_t[:o_ref.shape[0], :].astype(o_ref.dtype)


# ---------------------------------------------------------------------------
# One-time parameter preparation (hoist out of the per-call path).
# weight: (2, hidden) torch layout, bias: (2,)
# ---------------------------------------------------------------------------
def prepare_nsp_params(weight, bias, compute_dtype=None):
    weight = jnp.asarray(weight)
    bias = jnp.asarray(bias)
    C, H = weight.shape
    if compute_dtype is None:
        compute_dtype = weight.dtype
    w_pad = jnp.zeros((H, _CLASS_PAD), compute_dtype).at[:, :C].set(
        weight.T.astype(compute_dtype))
    b_pad = jnp.full((1, _CLASS_PAD), -1e30, jnp.float32).at[0, :C].set(
        bias.astype(jnp.float32))
    return w_pad, b_pad, C


# ---------------------------------------------------------------------------
# Tile / VMEM sizing
# ---------------------------------------------------------------------------
def _choose_tm(N, H, itemsize, tile_m):
    if tile_m is None:
        tile_m = 2048 if itemsize <= 2 else 1024
    tile_m = max(_LANE, (tile_m // _LANE) * _LANE)
    # Keep the double-buffered x stream <= ~16 MiB of VMEM (safe on every gen,
    # incl. v7x's 64 MiB per-TC and v5e once the scoped limit is raised).
    cap_vmem = max(_LANE, ((16 * 2**20) // (2 * H * itemsize)) // _LANE * _LANE)
    # Keep >= 4 grid steps when the batch allows it so v7x megacore can shard
    # the "parallel" axis across both TensorCores.
    if N >= 4 * _LANE:
        cap_mc = max(_LANE, (N // 4) // _LANE * _LANE)
    else:
        cap_mc = _LANE
    return min(tile_m, cap_vmem, cap_mc)


def _vmem_limit_bytes(tm, H, in_isz, out_isz):
    need = (2 * tm * H * in_isz              # double-buffered x stream
            + 2 * H * _CLASS_PAD * in_isz    # weight (constant index map)
            + 2 * _CLASS_PAD * 4             # bias
            + 2 * 8 * tm * out_isz           # (C, TM) out block, sublane padded
            + 6 * tm * _CLASS_PAD * 4)       # f32 temporaries
    return int(min(56 * 2**20, max(32 * 2**20, need + 16 * 2**20)))


# ---------------------------------------------------------------------------
# Forward: x of shape (..., hidden) -> log-probs of shape (..., 2)
# ---------------------------------------------------------------------------
def next_sentence_prediction(x, weight=None, bias=None, *, prepared=None,
                             tile_m=None):
    orig_shape = x.shape
    H = orig_shape[-1]
    if prepared is None:
        prepared = prepare_nsp_params(weight, bias, compute_dtype=x.dtype)
    w_pad, b_pad, C = prepared

    x2 = x.reshape(-1, H)
    N = x2.shape[0]
    in_isz = jnp.dtype(x.dtype).itemsize
    out_isz = in_isz

    if N < _LANE:
        # Tiny batch only: pad rows once up to a single 128-row tile.  This is
        # a <64 KiB copy; large batches are never padded (ragged last block).
        x2 = jnp.pad(x2, ((0, _LANE - N), (0, 0)))
        tm = _LANE
    else:
        tm = _choose_tm(N, H, in_isz, tile_m)
    nt = pl.cdiv(x2.shape[0], tm)

    out = pl.pallas_call(
        _nsp_kernel,
        out_shape=jax.ShapeDtypeStruct((C, nt * tm), x.dtype),
        grid=(nt,),
        in_specs=[
            pl.BlockSpec((tm, H), lambda i: (i, 0)),
            pl.BlockSpec((H, _CLASS_PAD), lambda i: (0, 0)),
            pl.BlockSpec((1, _CLASS_PAD), lambda i: (0, 0)),
        ],
        out_specs=pl.BlockSpec((C, tm), lambda i: (0, i)),
        compiler_params=pltpu.CompilerParams(
            dimension_semantics=("parallel",),
            vmem_limit_bytes=_vmem_limit_bytes(tm, H, in_isz, out_isz)),
    )(x2, w_pad, b_pad)

    # (C, nt*tm) -> (N, C) -> original leading dims.  The transpose here is on
    # a tiny (2, N) array, negligible vs. the removed (N, 128) kernel write.
    return out[:, :N].T.reshape(*orig_shape[:-1], C)


# ---------------------------------------------------------------------------
# Deterministic example + self-check
# ---------------------------------------------------------------------------
if __name__ == "__main__":
    # --- small demo matching the module (batch=2, hidden=32) -------------
    B, H = 2, 32
    key = jax.random.PRNGKey(0)
    kx, kw, kb = jax.random.split(key, 3)

    x = jax.random.normal(kx, (B, H), jnp.float32)

    # nn.Linear(hidden, 2) with xavier_uniform_ weight init (as in the module).
    a = math.sqrt(6.0 / (H + 2))
    weight = jax.random.uniform(kw, (2, H), jnp.float32, -a, a)   # torch layout
    bound = 1.0 / math.sqrt(H)
    bias = jax.random.uniform(kb, (2,), jnp.float32, -bound, bound)

    prepared = prepare_nsp_params(weight, bias, compute_dtype=x.dtype)
    out = jax.block_until_ready(next_sentence_prediction(x, prepared=prepared))

    ref = jax.nn.log_softmax(x @ weight.T + bias, axis=-1)
    assert out.shape == (B, 2)
    assert jnp.allclose(out, ref, atol=1e-5, rtol=1e-5)

    # --- multi-tile ragged path (no input padding, partial last block) ----
    N2, H2 = 300, 256
    k2x, k2w, k2b = jax.random.split(jax.random.PRNGKey(1), 3)
    x2 = jax.random.normal(k2x, (N2, H2), jnp.float32)
    w2 = jax.random.uniform(k2w, (2, H2), jnp.float32, -0.05, 0.05)
    b2 = jax.random.uniform(k2b, (2,), jnp.float32, -0.05, 0.05)

    out2 = jax.block_until_ready(
        next_sentence_prediction(x2, w2, b2, tile_m=128))   # grid=3, tail=44 rows
    ref2 = jax.nn.log_softmax(x2 @ w2.T + b2, axis=-1)
    assert out2.shape == (N2, 2)
    assert jnp.allclose(out2, ref2, atol=1e-4, rtol=1e-4)

    print("KERNEL_OK")
</pallas_src>

<mosaic_0001>
module attributes {stable_mosaic.version = 11 : i64} {
  func.func @_nsp_kernel(%arg0: i32, %arg1: memref<128x32xf32, #tpu.memory_space<vmem>>, %arg2: memref<32x128xf32, #tpu.memory_space<vmem>>, %arg3: memref<1x128xf32, #tpu.memory_space<vmem>>, %arg4: memref<2x128xf32, #tpu.memory_space<vmem>>) attributes {dimension_semantics = [#tpu.dimension_semantics<parallel>], iteration_bounds = array<i64: 1>, scalar_prefetch = 0 : i64, scratch_operands = 0 : i64, tpu.core_type = #tpu.core_type<tc>, window_params = [{transform_indices = @transform_0, window_bounds = array<i64: 128, 32>}, {pipeline_mode = #tpu.pipeline_mode<synchronous>, transform_indices = @transform_1, window_bounds = array<i64: 32, 128>}, {pipeline_mode = #tpu.pipeline_mode<synchronous>, transform_indices = @transform_2, window_bounds = array<i64: 1, 128>}, {transform_indices = @transform_3, window_bounds = array<i64: 2, 128>}]} {
    %c0 = arith.constant 0 : index
    %c0_0 = arith.constant 0 : index
    %0 = vector.load %arg1[%c0, %c0_0] : memref<128x32xf32, #tpu.memory_space<vmem>>, vector<128x32xf32>
    %c0_1 = arith.constant 0 : index
    %c0_2 = arith.constant 0 : index
    %1 = vector.load %arg2[%c0_1, %c0_2] : memref<32x128xf32, #tpu.memory_space<vmem>>, vector<32x128xf32>
    %cst = arith.constant dense<0.000000e+00> : vector<128x128xf32>
    %2 = tpu.matmul %0, %1, %cst {dimension_numbers = #tpu.dot_dimension_numbers<[1], [0], [0], [1], [0, 0, 1, 1], [], []>} : vector<128x32xf32>, vector<32x128xf32>, vector<128x128xf32> -> vector<128x128xf32>
    %c0_3 = arith.constant 0 : index
    %c0_4 = arith.constant 0 : index
    %3 = vector.load %arg3[%c0_3, %c0_4] : memref<1x128xf32, #tpu.memory_space<vmem>>, vector<1x128xf32>
    %4 = vector.broadcast %3 : vector<1x128xf32> to vector<128x128xf32>
    %5 = arith.addf %2, %4 : vector<128x128xf32>
    %cst_5 = arith.constant dense<0xFF800000> : vector<128xf32>
    %6 = vector.multi_reduction <maximumf>, %5, %cst_5 [1] : vector<128x128xf32> to vector<128xf32>
    %7 = vector.shape_cast %6 : vector<128xf32> to vector<128x1xf32>
    %8 = vector.broadcast %7 : vector<128x1xf32> to vector<128x128xf32>
    %9 = arith.subf %5, %8 : vector<128x128xf32>
    %10 = math.exp %9 : vector<128x128xf32>
    %cst_6 = arith.constant dense<0.000000e+00> : vector<128xf32>
    %11 = vector.multi_reduction <add>, %10, %cst_6 [1] : vector<128x128xf32> to vector<128xf32>
    %12 = vector.shape_cast %11 : vector<128xf32> to vector<128x1xf32>
    %13 = math.log %12 : vector<128x1xf32>
    %14 = arith.addf %7, %13 : vector<128x1xf32>
    %15 = vector.broadcast %14 : vector<128x1xf32> to vector<128x128xf32>
    %16 = arith.subf %5, %15 : vector<128x128xf32>
    %17 = tpu.transpose %16, [1, 0] : vector<128x128xf32> -> vector<128x128xf32>
    %18 = vector.extract_strided_slice %17 {offsets = [0, 0], sizes = [2, 128], strides = [1, 1]} : vector<128x128xf32> to vector<2x128xf32>
    %c0_7 = arith.constant 0 : index
    %c0_8 = arith.constant 0 : index
    %19 = vector.load %arg4[%c0_7, %c0_8] : memref<2x128xf32, #tpu.memory_space<vmem>>, vector<2x128xf32>
    tpu.vector_store %arg4[%c0_7, %c0_8], %18 {strides = array<i32>} : memref<2x128xf32, #tpu.memory_space<vmem>>, vector<2x128xf32>,
    return
  }
  func.func @transform_0(%arg0: i32) -> (i32, i32) {
    %c0_i32 = arith.constant 0 : i32
    %c0_i32_0 = arith.constant 0 : i32
    return %arg0, %c0_i32 : i32, i32
  }
  func.func @transform_1(%arg0: i32) -> (i32, i32) {
    %c0_i32 = arith.constant 0 : i32
    %c0_i32_0 = arith.constant 0 : i32
    %c0_i32_1 = arith.constant 0 : i32
    return %c0_i32, %c0_i32_0 : i32, i32
  }
  func.func @transform_2(%arg0: i32) -> (i32, i32) {
    %c0_i32 = arith.constant 0 : i32
    %c0_i32_0 = arith.constant 0 : i32
    %c0_i32_1 = arith.constant 0 : i32
    return %c0_i32, %c0_i32_0 : i32, i32
  }
  func.func @transform_3(%arg0: i32) -> (i32, i32) {
    %c0_i32 = arith.constant 0 : i32
    %c0_i32_0 = arith.constant 0 : i32
    return %c0_i32, %arg0 : i32, i32
  }
}

</mosaic_0001>

<llo_original>
// kernel: tpu_custom_call.1
$region0: #{tpu_custom_call.1}
  #allocation0 [shape = 'u32[]', space=smem, size = 0x4, offset = 0x4, fixed_abs, tag = 'smem constant byte address 0x4 - core index']
  #allocation1 [shape = 'u32[144,128]{1,0:T(1,128)}', space=vmem, size = 0x12000, scoped, tag = 'internal scratch']
  %s0 = inlined_call_operand.vmem [shape: f32[128,32], index: 0, kind: input, shape index: {}]
  %s1 = inlined_call_operand.vmem [shape: f32[32,128], index: 1, kind: input, shape index: {}]
  %s2 = inlined_call_operand.vmem [shape: f32[1,128], index: 2, kind: input, shape index: {}]
  %s3 = inlined_call_operand.hbm [shape: f32[2,128], index: 3, kind: output, shape index: {}]
  %s4 = sld [smem:[#allocation0]]
  $region22: #{tpu_custom_call.1} parent=0
    _
  %s6 = ssub.s32 1, %s4
  %s7 = scalar_select 0, %s6, %s4
  $region1: #{tpu_custom_call.1} parent=0
    #allocation2 [shape = 'u8[1024]{0}', space=vmem, size = 0x400, scoped, tag = 'output window, operand 0, single buffered']
    #allocation3 [shape = 's32[1]{0}', space=sflag, size = 0x4, scoped, tag = 'scoped memory for tpu_custom_call.1']
    %8 = vsyncpa [#allocation3], 0
    // Predicated region
    $region2: #{tpu_custom_call.1} parent=1 // pred_check
      _
    $region3: #{tpu_custom_call.1} parent=1 // pred_check_branch
      %10 = sbr.rel (0) target = $region5
    $region4: #{tpu_custom_call.1} parent=1 // pred_region
      _
    $region5: #{tpu_custom_call.1} parent=1 // pred_fallthru
      _
    // Predicated region
    $region6: #{tpu_custom_call.1} parent=1 // pred_check
      _
    $region7: #{tpu_custom_call.1} parent=1 // pred_check_branch
      %12 = sbr.rel (0) target = $region9
    $region8: #{tpu_custom_call.1} parent=1 // pred_region
      _
    $region9: #{tpu_custom_call.1} parent=1 // pred_fallthru
      _
    // Predicated region
    $region10: #{tpu_custom_call.1} parent=1 // pred_check
      _
    $region11: #{tpu_custom_call.1} parent=1 // pred_check_branch
      %14 = sbr.rel (0) target = $region13
    $region12: #{tpu_custom_call.1} parent=1 // pred_region
      _
    $region13: #{tpu_custom_call.1} parent=1 // pred_fallthru
      _
    %v15 = vld [vmem:[%s0] sm:$0xff]
    %v16 = vld [vmem:[%s0 + $0x8] sm:$0xff]
    %v17 = vld [vmem:[%s0 + $0x10] sm:$0xff]
    %v18 = vld [vmem:[%s0 + $0x18] sm:$0xff]
    %v19 = vld [vmem:[%s0 + $0x20] sm:$0xff]
    %v20 = vld [vmem:[%s0 + $0x28] sm:$0xff]
    %v21 = vld [vmem:[%s0 + $0x30] sm:$0xff]
    %v22 = vld [vmem:[%s0 + $0x38] sm:$0xff]
    %v23 = vld [vmem:[%s0 + $0x40] sm:$0xff]
    %v24 = vld [vmem:[%s0 + $0x48] sm:$0xff]
    %v25 = vld [vmem:[%s0 + $0x50] sm:$0xff]
    %v26 = vld [vmem:[%s0 + $0x58] sm:$0xff]
    %v27 = vld [vmem:[%s0 + $0x60] sm:$0xff]
    %v28 = vld [vmem:[%s0 + $0x68] sm:$0xff]
    %v29 = vld [vmem:[%s0 + $0x70] sm:$0xff]
    %v30 = vld [vmem:[%s0 + $0x78] sm:$0xff]
    %v31 = vld [vmem:[%s1] sm:$0xff]
    %v32 = vld [vmem:[%s1 + $0x8] sm:$0xff]
    %v33 = vld [vmem:[%s1 + $0x10] sm:$0xff]
    %v34 = vld [vmem:[%s1 + $0x18] sm:$0xff]
    %v35 = vld [vmem:[%s2] sm:$0x1]
    %v37 = vlaneseq
    %v38 = vshrl.u32 %v37, 7
    %v39 = vsub.s32 0, %v38
    %v40 = vrot.slane %v35, %v39
    %vm42 = vcmask 261120
    %v44 = vsel %vm42, %v15, 0
    %v47 = vsel %vm42, %v16, 0
    %v50 = vsel %vm42, %v17, 0
    %v53 = vsel %vm42, %v18, 0
    %v56 = vsel %vm42, %v19, 0
    %v59 = vsel %vm42, %v20, 0
    %v62 = vsel %vm42, %v21, 0
    %v65 = vsel %vm42, %v22, 0
    %v68 = vsel %vm42, %v23, 0
    %v71 = vsel %vm42, %v24, 0
    %v74 = vsel %vm42, %v25, 0
    %v77 = vsel %vm42, %v26, 0
    %v80 = vsel %vm42, %v27, 0
    %v83 = vsel %vm42, %v28, 0
    %v86 = vsel %vm42, %v29, 0
    %v89 = vsel %vm42, %v30, 0
    %91 = vmatprep.subr.mxu0 0.0
    %92 = vmatpush1.msra.mxu0 0.0
    %93 = vmatprep.subr.mxu0 0.0
    %94 = vmatpush1.msra.mxu0 0.0
    %95 = vmatprep.subr.mxu0 0.0
    %96 = vmatpush1.msra.mxu0 0.0
    %97 = vmatprep.subr.mxu0 0.0
    %98 = vmatpush1.msra.mxu0 0.0
    %99 = vmatprep.subr.mxu0 0.0
    %100 = vmatpush1.msra.mxu0 0.0
    %101 = vmatprep.subr.mxu0 0.0
    %102 = vmatpush1.msra.mxu0 0.0
    %103 = vmatprep.subr.mxu0 0.0
    %104 = vmatpush1.msra.mxu0 0.0
    %105 = vmatprep.subr.mxu0 0.0
    %106 = vmatpush1.msra.mxu0 0.0
    %107 = vmatprep.subr.mxu0 0.0
    %108 = vmatpush1.msra.mxu0 0.0
    %109 = vmatprep.subr.mxu0 0.0
    %110 = vmatpush1.msra.mxu0 0.0
    %111 = vmatprep.subr.mxu0 0.0
    %112 = vmatpush1.msra.mxu0 0.0
    %113 = vmatprep.subr.mxu0 0.0
    %114 = vmatpush1.msra.mxu0 0.0
    %115 = vmatprep.subr.mxu0 0.0
    %116 = vmatpush1.msra.mxu0 %v34
    %117 = vmatprep.subr.mxu0 0.0
    %118 = vmatpush1.msra.mxu0 %v33
    %119 = vmatprep.subr.mxu0 0.0
    %120 = vmatpush1.msra.mxu0 %v32
    %121 = vmatprep.subr.mxu0 0.0
    %122 = vmatpush1.msra.mxu0 %v31
    %123 = vmatprep.subr.mxu0 0.0
    %124 = vmatpush2.msra.mxu0 0.0
    %125 = vmatprep.subr.mxu0 0.0
    %126 = vmatpush2.msra.mxu0 0.0
    %127 = vmatprep.subr.mxu0 0.0
    %128 = vmatpush2.msra.mxu0 0.0
    %129 = vmatprep.subr.mxu0 0.0
    %130 = vmatpush2.msra.mxu0 0.0
    %131 = vmatprep.subr.mxu0 0.0
    %132 = vmatpush2.msra.mxu0 0.0
    %133 = vmatprep.subr.mxu0 0.0
    %134 = vmatpush2.msra.mxu0 0.0
    %135 = vmatprep.subr.mxu0 0.0
    %136 = vmatpush2.msra.mxu0 0.0
    %137 = vmatprep.subr.mxu0 0.0
    %138 = vmatpush2.msra.mxu0 0.0
    %139 = vmatprep.subr.mxu0 0.0
    %140 = vmatpush2.msra.mxu0 0.0
    %141 = vmatprep.subr.mxu0 0.0
    %142 = vmatpush2.msra.mxu0 0.0
    %143 = vmatprep.subr.mxu0 0.0
    %144 = vmatpush2.msra.mxu0 0.0
    %145 = vmatprep.subr.mxu0 0.0
    %146 = vmatpush2.msra.mxu0 0.0
    %147 = vmatprep.subr.mxu0 0.0
    %148 = vmatpush2.msra.mxu0 0.0
    %149 = vmatprep.subr.mxu0 0.0
    %150 = vmatpush2.msra.mxu0 0.0
    %151 = vmatprep.subr.mxu0 0.0
    %152 = vmatpush2.msra.mxu0 0.0
    %153 = vmatprep.subr.mxu0 0.0
    %154 = vmatpush2.msra.mxu0 0.0
    %155 = vmatprep.mubr.f32.mxu0 0.0
    %156 = vmatmul.mubr.f32.gmra.mxu0 %v44
    %v157 = vpop.f32.mrf.mxu0
    %v158 = vadd.f32 %v40, %v157
    %v159 = vpop.f32.mrf.mxu0
    %160 = vmatprep.mubr.f32.mxu0 0.0
    %161 = vmatmul.mubr.f32.gmra.mxu0 %v47
    %v162 = vpop.f32.mrf.mxu0
    %v163 = vadd.f32 %v40, %v162
    %v164 = vpop.f32.mrf.mxu0
    %165 = vmatprep.mubr.f32.mxu0 0.0
    %166 = vmatmul.mubr.f32.gmra.mxu0 %v50
    %v167 = vpop.f32.mrf.mxu0
    %v168 = vadd.f32 %v40, %v167
    %v169 = vpop.f32.mrf.mxu0
    %170 = vmatprep.mubr.f32.mxu0 0.0
    %171 = vmatmul.mubr.f32.gmra.mxu0 %v53
    %v172 = vpop.f32.mrf.mxu0
    %v173 = vadd.f32 %v40, %v172
    %v174 = vpop.f32.mrf.mxu0
    %175 = vmatprep.mubr.f32.mxu0 0.0
    %176 = vmatmul.mubr.f32.gmra.mxu0 %v56
    %v177 = vpop.f32.mrf.mxu0
    %v178 = vadd.f32 %v40, %v177
    %v179 = vpop.f32.mrf.mxu0
    %180 = vmatprep.mubr.f32.mxu0 0.0
    %181 = vmatmul.mubr.f32.gmra.mxu0 %v59
    %v182 = vpop.f32.mrf.mxu0
    %v183 = vadd.f32 %v40, %v182
    %v184 = vpop.f32.mrf.mxu0
    %185 = vmatprep.mubr.f32.mxu0 0.0
    %186 = vmatmul.mubr.f32.gmra.mxu0 %v62
    %v187 = vpop.f32.mrf.mxu0
    %v188 = vadd.f32 %v40, %v187
    %v189 = vpop.f32.mrf.mxu0
    %190 = vmatprep.mubr.f32.mxu0 0.0
    %191 = vmatmul.mubr.f32.gmra.mxu0 %v65
    %v192 = vpop.f32.mrf.mxu0
    %v193 = vadd.f32 %v40, %v192
    %v194 = vpop.f32.mrf.mxu0
    %195 = vmatprep.mubr.f32.mxu0 0.0
    %196 = vmatmul.mubr.f32.gmra.mxu0 %v68
    %v197 = vpop.f32.mrf.mxu0
    %v198 = vadd.f32 %v40, %v197
    %v199 = vpop.f32.mrf.mxu0
    %200 = vmatprep.mubr.f32.mxu0 0.0
    %201 = vmatmul.mubr.f32.gmra.mxu0 %v71
    %v202 = vpop.f32.mrf.mxu0
    %v203 = vadd.f32 %v40, %v202
    %v204 = vpop.f32.mrf.mxu0
    %205 = vmatprep.mubr.f32.mxu0 0.0
    %206 = vmatmul.mubr.f32.gmra.mxu0 %v74
    %v207 = vpop.f32.mrf.mxu0
    %v208 = vadd.f32 %v40, %v207
    %v209 = vpop.f32.mrf.mxu0
    %210 = vmatprep.mubr.f32.mxu0 0.0
    %211 = vmatmul.mubr.f32.gmra.mxu0 %v77
    %v212 = vpop.f32.mrf.mxu0
    %v213 = vadd.f32 %v40, %v212
    %v214 = vpop.f32.mrf.mxu0
    %215 = vmatprep.mubr.f32.mxu0 0.0
    %216 = vmatmul.mubr.f32.gmra.mxu0 %v80
    %v217 = vpop.f32.mrf.mxu0
    %v218 = vadd.f32 %v40, %v217
    %v219 = vpop.f32.mrf.mxu0
    %220 = vmatprep.mubr.f32.mxu0 0.0
    %221 = vmatmul.mubr.f32.gmra.mxu0 %v83
    %v222 = vpop.f32.mrf.mxu0
    %v223 = vadd.f32 %v40, %v222
    %v224 = vpop.f32.mrf.mxu0
    %225 = vmatprep.mubr.f32.mxu0 0.0
    %226 = vmatmul.mubr.f32.gmra.mxu0 %v86
    %v227 = vpop.f32.mrf.mxu0
    %v228 = vadd.f32 %v40, %v227
    %v229 = vpop.f32.mrf.mxu0
    %230 = vmatprep.mubr.f32.mxu0 0.0
    %231 = vmatmul.mubr.f32.gmra.mxu0 %v89
    %v232 = vpop.f32.mrf.mxu0
    %v233 = vadd.f32 %v40, %v232
    %v234 = vpop.f32.mrf.mxu0
    %235 = vdwg.mxu0
    %236 = vmax.xlane.f32.xlu0 %v158
    %v237 = vpop.xlane.xlu0 %236
    %238 = vmax.xlane.f32.xlu0 %v163
    %v239 = vpop.xlane.xlu0 %238
    %240 = vmax.xlane.f32.xlu0 %v168
    %v241 = vpop.xlane.xlu0 %240
    %242 = vmax.xlane.f32.xlu0 %v173
    %v243 = vpop.xlane.xlu0 %242
    %244 = vmax.xlane.f32.xlu0 %v178
    %v245 = vpop.xlane.xlu0 %244
    %246 = vmax.xlane.f32.xlu0 %v183
    %v247 = vpop.xlane.xlu0 %246
    %248 = vmax.xlane.f32.xlu0 %v188
    %v249 = vpop.xlane.xlu0 %248
    %250 = vmax.xlane.f32.xlu0 %v193
    %v251 = vpop.xlane.xlu0 %250
    %252 = vmax.xlane.f32.xlu0 %v198
    %v253 = vpop.xlane.xlu0 %252
    %254 = vmax.xlane.f32.xlu0 %v203
    %v255 = vpop.xlane.xlu0 %254
    %256 = vmax.xlane.f32.xlu0 %v208
    %v257 = vpop.xlane.xlu0 %256
    %258 = vmax.xlane.f32.xlu0 %v213
    %v259 = vpop.xlane.xlu0 %258
    %260 = vmax.xlane.f32.xlu0 %v218
    %v261 = vpop.xlane.xlu0 %260
    %262 = vmax.xlane.f32.xlu0 %v223
    %v263 = vpop.xlane.xlu0 %262
    %264 = vmax.xlane.f32.xlu0 %v228
    %v265 = vpop.xlane.xlu0 %264
    %266 = vmax.xlane.f32.xlu0 %v233
    %v267 = vpop.xlane.xlu0 %266
    %v268 = vsub.f32 %v158, %v237
    %v269 = vsub.f32 %v163, %v239
    %v270 = vsub.f32 %v168, %v241
    %v271 = vsub.f32 %v173, %v243
    %v272 = vsub.f32 %v178, %v245
    %v273 = vsub.f32 %v183, %v247
    %v274 = vsub.f32 %v188, %v249
    %v275 = vsub.f32 %v193, %v251
    %v276 = vsub.f32 %v198, %v253
    %v277 = vsub.f32 %v203, %v255
    %v278 = vsub.f32 %v208, %v257
    %v279 = vsub.f32 %v213, %v259
    %v280 = vsub.f32 %v218, %v261
    %v281 = vsub.f32 %v223, %v263
    %v282 = vsub.f32 %v228, %v265
    %v283 = vsub.f32 %v233, %v267
    %v284 = vmul.f32 %v268, 1.442695
    %v285 = vpow.pop %v284
    %v286 = vmul.f32 %v269, 1.442695
    %v287 = vpow.pop %v286
    %v288 = vmul.f32 %v270, 1.442695
    %v289 = vpow.pop %v288
    %v290 = vmul.f32 %v271, 1.442695
    %v291 = vpow.pop %v290
    %v292 = vmul.f32 %v272, 1.442695
    %v293 = vpow.pop %v292
    %v294 = vmul.f32 %v273, 1.442695
    %v295 = vpow.pop %v294
    %v296 = vmul.f32 %v274, 1.442695
    %v297 = vpow.pop %v296
    %v298 = vmul.f32 %v275, 1.442695
    %v299 = vpow.pop %v298
    %v300 = vmul.f32 %v276, 1.442695
    %v301 = vpow.pop %v300
    %v302 = vmul.f32 %v277, 1.442695
    %v303 = vpow.pop %v302
    %v304 = vmul.f32 %v278, 1.442695
    %v305 = vpow.pop %v304
    %v306 = vmul.f32 %v279, 1.442695
    %v307 = vpow.pop %v306
    %v308 = vmul.f32 %v280, 1.442695
    %v309 = vpow.pop %v308
    %v310 = vmul.f32 %v281, 1.442695
    %v311 = vpow.pop %v310
    %v312 = vmul.f32 %v282, 1.442695
    %v313 = vpow.pop %v312
    %v314 = vmul.f32 %v283, 1.442695
    %v315 = vpow.pop %v314
    %316 = vadd.xlane.f32.xlu0 %v285
    %v317 = vpop.xlane.xlu0 %316
    %318 = vadd.xlane.f32.xlu0 %v287
    %v319 = vpop.xlane.xlu0 %318
    %320 = vadd.xlane.f32.xlu0 %v289
    %v321 = vpop.xlane.xlu0 %320
    %322 = vadd.xlane.f32.xlu0 %v291
    %v323 = vpop.xlane.xlu0 %322
    %324 = vadd.xlane.f32.xlu0 %v293
    %v325 = vpop.xlane.xlu0 %324
    %326 = vadd.xlane.f32.xlu0 %v295
    %v327 = vpop.xlane.xlu0 %326
    %328 = vadd.xlane.f32.xlu0 %v297
    %v329 = vpop.xlane.xlu0 %328
    %330 = vadd.xlane.f32.xlu0 %v299
    %v331 = vpop.xlane.xlu0 %330
    %332 = vadd.xlane.f32.xlu0 %v301
    %v333 = vpop.xlane.xlu0 %332
    %334 = vadd.xlane.f32.xlu0 %v303
    %v335 = vpop.xlane.xlu0 %334
    %336 = vadd.xlane.f32.xlu0 %v305
    %v337 = vpop.xlane.xlu0 %336
    %338 = vadd.xlane.f32.xlu0 %v307
    %v339 = vpop.xlane.xlu0 %338
    %340 = vadd.xlane.f32.xlu0 %v309
    %v341 = vpop.xlane.xlu0 %340
    %342 = vadd.xlane.f32.xlu0 %v311
    %v343 = vpop.xlane.xlu0 %342
    %344 = vadd.xlane.f32.xlu0 %v313
    %v345 = vpop.xlane.xlu0 %344
    %346 = vadd.xlane.f32.xlu0 %v315
    %v347 = vpop.xlane.xlu0 %346
    %v348 = vlog2.pop %v317
    %v349 = vmul.f32 %v348, 0.6931472
    %v350 = vlog2.pop %v319
    %v351 = vmul.f32 %v350, 0.6931472
    %v352 = vlog2.pop %v321
    %v353 = vmul.f32 %v352, 0.6931472
    %v354 = vlog2.pop %v323
    %v355 = vmul.f32 %v354, 0.6931472
    %v356 = vlog2.pop %v325
    %v357 = vmul.f32 %v356, 0.6931472
    %v358 = vlog2.pop %v327
    %v359 = vmul.f32 %v358, 0.6931472
    %v360 = vlog2.pop %v329
    %v361 = vmul.f32 %v360, 0.6931472
    %v362 = vlog2.pop %v331
    %v363 = vmul.f32 %v362, 0.6931472
    %v364 = vlog2.pop %v333
    %v365 = vmul.f32 %v364, 0.6931472
    %v366 = vlog2.pop %v335
    %v367 = vmul.f32 %v366, 0.6931472
    %v368 = vlog2.pop %v337
    %v369 = vmul.f32 %v368, 0.6931472
    %v370 = vlog2.pop %v339
    %v371 = vmul.f32 %v370, 0.6931472
    %v372 = vlog2.pop %v341
    %v373 = vmul.f32 %v372, 0.6931472
    %v374 = vlog2.pop %v343
    %v375 = vmul.f32 %v374, 0.6931472
    %v376 = vlog2.pop %v345
    %v377 = vmul.f32 %v376, 0.6931472
    %v378 = vlog2.pop %v347
    %v379 = vmul.f32 %v378, 0.6931472
    %v380 = vadd.f32 %v237, %v349
    %v381 = vadd.f32 %v239, %v351
    %v382 = vadd.f32 %v241, %v353
    %v383 = vadd.f32 %v243, %v355
    %v384 = vadd.f32 %v245, %v357
    %v385 = vadd.f32 %v247, %v359
    %v386 = vadd.f32 %v249, %v361
    %v387 = vadd.f32 %v251, %v363
    %v388 = vadd.f32 %v253, %v365
    %v389 = vadd.f32 %v255, %v367
    %v390 = vadd.f32 %v257, %v369
    %v391 = vadd.f32 %v259, %v371
    %v392 = vadd.f32 %v261, %v373
    %v393 = vadd.f32 %v263, %v375
    %v394 = vadd.f32 %v265, %v377
    %v395 = vadd.f32 %v267, %v379
    %v396 = vsub.f32 %v158, %v380
    %v397 = vsub.f32 %v163, %v381
    %v398 = vsub.f32 %v168, %v382
    %v399 = vsub.f32 %v173, %v383
    %v400 = vsub.f32 %v178, %v384
    %v401 = vsub.f32 %v183, %v385
    %v402 = vsub.f32 %v188, %v386
    %v403 = vsub.f32 %v193, %v387
    %v404 = vsub.f32 %v198, %v388
    %v405 = vsub.f32 %v203, %v389
    %v406 = vsub.f32 %v208, %v390
    %v407 = vsub.f32 %v213, %v391
    %v408 = vsub.f32 %v218, %v392
    %v409 = vsub.f32 %v223, %v393
    %v410 = vsub.f32 %v228, %v394
    %v411 = vsub.f32 %v233, %v395
    %412 = vxpose.xlu0.b32.start [1/16] %v396, 128
    %413 = vxpose.xlu0.b32.cont [2/16] %v397, 128
    %414 = vxpose.xlu0.b32.cont [3/16] %v398, 128
    %415 = vxpose.xlu0.b32.cont [4/16] %v399, 128
    %416 = vxpose.xlu0.b32.cont [5/16] %v400, 128
    %417 = vxpose.xlu0.b32.cont [6/16] %v401, 128
    %418 = vxpose.xlu0.b32.cont [7/16] %v402, 128
    %419 = vxpose.xlu0.b32.cont [8/16] %v403, 128
    %420 = vxpose.xlu0.b32.cont [9/16] %v404, 128
    %421 = vxpose.xlu0.b32.cont [10/16] %v405, 128
    %422 = vxpose.xlu0.b32.cont [11/16] %v406, 128
    %423 = vxpose.xlu0.b32.cont [12/16] %v407, 128
    %424 = vxpose.xlu0.b32.cont [13/16] %v408, 128
    %425 = vxpose.xlu0.b32.cont [14/16] %v409, 128
    %426 = vxpose.xlu0.b32.cont [15/16] %v410, 128
    %427 = vxpose.xlu0.b32.end [16/16] %v411, 128
    %v428 = vpop.trf.xlu0
    %v429 = vpop.trf.xlu0
    %v430 = vpop.trf.xlu0
    %v431 = vpop.trf.xlu0
    %v432 = vpop.trf.xlu0
    %v433 = vpop.trf.xlu0
    %v434 = vpop.trf.xlu0
    %v435 = vpop.trf.xlu0
    %v436 = vpop.trf.xlu0
    %v437 = vpop.trf.xlu0
    %v438 = vpop.trf.xlu0
    %v439 = vpop.trf.xlu0
    %v440 = vpop.trf.xlu0
    %v441 = vpop.trf.xlu0
    %v442 = vpop.trf.xlu0
    %v443 = vpop.trf.xlu0
    %444 = vst [vmem:[#allocation2] sm:$0x3] %v428
    // Predicated region
    $region14: #{tpu_custom_call.1} parent=1 // pred_check
      _
    $region15: #{tpu_custom_call.1} parent=1 // pred_check_branch
      %446 = sbr.rel (0) target = $region17
    $region16: #{tpu_custom_call.1} parent=1 // pred_region
      %s448 = ssub.s32 32, 32
      %449 = vsyncadd [#allocation3], %s448
      %s451 = sshll.u32 [#allocation2], 4
      %s452 = int_to_ptr.vmem [resolvable:$true] %s451
      %454 = dma.vmem_to_hbm [thread:$0]  %s452, 32, %s3, [#allocation3]
    $region17: #{tpu_custom_call.1} parent=1 // pred_fallthru
      _
    // Predicated region
    $region18: #{tpu_custom_call.1} parent=1 // pred_check
      _
    $region19: #{tpu_custom_call.1} parent=1 // pred_check_branch
      %456 = sbr.rel (0) target = $region21
    $region20: #{tpu_custom_call.1} parent=1 // pred_region
      %457 = dma.done [#allocation3], 32
    $region21: #{tpu_custom_call.1} parent=1 // pred_fallthru
      _
    %458 = vsyncpa [#allocation3], 1

</llo_original>
